<compile_context>
chip_gen: v7x
topology: tpu7x:2x2x1
jax: 0.10.0
libtpu: 0.0.40
codegen_flags: <defaults>
</compile_context>

<pallas_src>
import jax
import jax.numpy as jnp
import numpy as np
from jax.experimental import pallas as pl
from jax.experimental.pallas import tpu as pltpu


# ----------------------------------------------------------------------------
# Module config + deterministic init (mirrors the PyTorch module)
# ----------------------------------------------------------------------------
class Params:
    n_channels = 4
    n_filters = [8, 32]
    kernel_sizes = [5, 3]          # odd kernels (PyTorch 'same' is symmetric)
    n_strides = [1, 2]


def init_weights(key, params):
    layers = []
    c_in = params.n_channels
    for i, c_out in enumerate(params.n_filters):
        K = params.kernel_sizes[i]
        key, kw, kb = jax.random.split(key, 3)
        bound = 1.0 / np.sqrt(c_in * K)                 # PyTorch Conv1d default init
        w = jax.random.uniform(kw, (c_out, c_in, K), jnp.float32, -bound, bound)
        b = jax.random.uniform(kb, (c_out,), jnp.float32, -bound, bound)
        layers.append((w, b))
        c_in = c_out
    gamma = jnp.ones((params.n_filters[-1],), jnp.float32)   # nn.init.ones_
    beta = jnp.zeros((params.n_filters[-1],), jnp.float32)   # nn.init.zeros_
    return layers, gamma, beta


# ----------------------------------------------------------------------------
# Fused forward: conv stack + BatchNorm1d in a single grid-less pallas_call
# ----------------------------------------------------------------------------
def conv_tokenizer_forward(x, layers, gamma, beta, params):
    """X: (B, seq_len, n_channels) -> T: (B, token_len, d_model)."""
    B, L, C0 = x.shape
    n_layers = len(layers)

    # Static per-layer geometry + per-tap weight stacking (weight-load time).
    cfgs, taps, biases = [], [], []
    lin, cin = L, C0
    for i, (w, b) in enumerate(layers):
        c_out, c_in, ksz = w.shape
        assert c_in == cin
        s = params.n_strides[i]
        # padding='same' (stride 1) and _cal_conv_padding both give (K-1)//2
        # for odd kernels with dilation=1.
        pad = (ksz - 1) // 2
        lout = (lin + 2 * pad - ksz) // s + 1
        cfgs.append(dict(K=ksz, s=s, pad=pad, Lin=lin, Lpad=lin + 2 * pad,
                         Lout=lout, Cin=c_in))
        # (C_out, C_in, K) -> (K, C_in, C_out): tap k is the (C_in, C_out) RHS
        # of one shifted matmul.
        taps.append(jnp.transpose(w, (2, 1, 0)).astype(jnp.float32))
        if i < n_layers - 1:
            biases.append(b.reshape(1, c_out).astype(jnp.float32))
        # Last layer's bias intentionally dropped: (x+b) - mean(x+b) = x - mean(x),
        # so it cancels exactly under the train-mode BatchNorm that follows.
        lin, cin = lout, c_out
    L_out, C_out = cfgs[-1]["Lout"], params.n_filters[-1]
    n_w, n_b = len(taps), len(biases)

    def kernel(*args):
        x_ref = args[0]
        w_refs = args[1:1 + n_w]
        b_refs = args[1 + n_w:1 + n_w + n_b]
        g_ref = args[1 + n_w + n_b]
        bt_ref = args[2 + n_w + n_b]
        o_ref = args[3 + n_w + n_b]
        pad_refs = args[4 + n_w + n_b:]

        cur = None                       # (B*Lin_i, Cin_i) activation value
        for i, cfg in enumerate(cfgs):
            K, s, pad = cfg["K"], cfg["s"], cfg["pad"]
            Lin, Lpad, Lout, Cin = cfg["Lin"], cfg["Lpad"], cfg["Lout"], cfg["Cin"]
            pad_ref = pad_refs[i]

            # --- zero-pad the layer input in VMEM (done exactly once) ---
            pad_ref[...] = jnp.zeros((B * Lpad, Cin), jnp.float32)
            for b in range(B):
                r0 = b * Lpad + pad
                src = x_ref[b] if cur is None else cur[b * Lin:(b + 1) * Lin, :]
                pad_ref[r0:r0 + Lin, :] = src

            # --- conv as K shifted dots, batch folded into the M dimension:
            #     acc[(b,j), co] += sum_ci padded[b, j*s + k, ci] * W[k, ci, co]
            acc = None
            for k in range(K):
                def tap_rows(b, _k=k):
                    st = b * Lpad + _k
                    idx = pl.ds(st, Lout) if s == 1 else pl.ds(st, Lout, s)
                    return pad_ref[idx, :]                    # (Lout, Cin)
                rows = (jnp.concatenate([tap_rows(b) for b in range(B)], axis=0)
                        if B > 1 else tap_rows(0))            # (B*Lout, Cin)
                t = jnp.dot(rows, w_refs[i][k],
                            preferred_element_type=jnp.float32)
                acc = t if acc is None else acc + t
            if i < n_layers - 1:
                acc = acc + b_refs[i][...]
            cur = acc                                         # (B*Lout, Cout)

        # --- train-mode BatchNorm1d (eps=1e-5) over (batch, length) per channel,
        #     numerically safe two-pass centered variance, single HBM store.
        # TODO(synk): BatchNorm1d running-mean/var buffers (momentum=0.1) are
        # module state, not part of the returned tensor; not updated here.
        n = float(B * L_out)
        mean = jnp.sum(cur, axis=0, keepdims=True) / n
        d = cur - mean
        var = jnp.sum(d * d, axis=0, keepdims=True) / n       # biased batch variance
        o_ref[...] = d * (jax.lax.rsqrt(var + 1e-5) * g_ref[...]) + bt_ref[...]

    operands = ([x.astype(jnp.float32)] + taps + biases
                + [gamma.reshape(1, C_out).astype(jnp.float32),
                   beta.reshape(1, C_out).astype(jnp.float32)])
    scratch_shapes = [pltpu.VMEM((B * cfg["Lpad"], cfg["Cin"]), jnp.float32)
                      for cfg in cfgs]

    out2d = pl.pallas_call(
        kernel,
        out_shape=jax.ShapeDtypeStruct((B * L_out, C_out), jnp.float32),
        scratch_shapes=scratch_shapes,
    )(*operands)
    # Row order in the kernel is row = b*L_out + j, so this wrapper-side
    # reshape is a free, exact inverse of the folding.
    return out2d.reshape(B, L_out, C_out)


# ----------------------------------------------------------------------------
# Pure-JAX reference (correctness check)
# ----------------------------------------------------------------------------
def reference_forward(x, layers, gamma, beta, params):
    for i, (w, b) in enumerate(layers):
        K = params.kernel_sizes[i]
        s = params.n_strides[i]
        pad = (K - 1) // 2
        x_ncl = jnp.transpose(x, (0, 2, 1))
        y = jax.lax.conv_general_dilated(
            x_ncl, w, (s,), [(pad, pad)],
            dimension_numbers=("NCH", "OIH", "NCH"),
            precision=jax.lax.Precision.HIGHEST)
        y = y + b[None, :, None]
        x = jnp.transpose(y, (0, 2, 1))
    mean = jnp.mean(x, axis=(0, 1), keepdims=True)
    var = jnp.mean((x - mean) ** 2, axis=(0, 1), keepdims=True)
    return (x - mean) * jax.lax.rsqrt(var + 1e-5) * gamma.reshape(1, 1, -1) \
        + beta.reshape(1, 1, -1)


# ----------------------------------------------------------------------------
if __name__ == "__main__":
    params = Params()
    key = jax.random.PRNGKey(0)
    key, kx, kw = jax.random.split(key, 3)

    B, L = 2, 16
    x = jax.random.normal(kx, (B, L, params.n_channels), jnp.float32)

    layers, gamma, beta = init_weights(kw, params)

    out = conv_tokenizer_forward(x, layers, gamma, beta, params)
    out = jax.block_until_ready(out)

    ref = reference_forward(x, layers, gamma, beta, params)
    ref = jax.block_until_ready(ref)

    assert out.shape == (B, L // params.n_strides[-1], params.n_filters[-1]), out.shape
    np.testing.assert_allclose(np.asarray(out), np.asarray(ref), rtol=2e-3, atol=2e-3)

    print("KERNEL_OK")
</pallas_src>

<mosaic_0001>
module attributes {stable_mosaic.version = 11 : i64} {
  func.func @kernel(%arg0: memref<2x16x4xf32, #tpu.memory_space<vmem>>, %arg1: memref<5x4x8xf32, #tpu.memory_space<vmem>>, %arg2: memref<3x8x32xf32, #tpu.memory_space<vmem>>, %arg3: memref<1x8xf32, #tpu.memory_space<vmem>>, %arg4: memref<1x32xf32, #tpu.memory_space<vmem>>, %arg5: memref<1x32xf32, #tpu.memory_space<vmem>>, %arg6: memref<16x32xf32, #tpu.memory_space<vmem>>, %arg7: memref<40x4xf32, #tpu.memory_space<vmem>>, %arg8: memref<36x8xf32, #tpu.memory_space<vmem>>) attributes {dimension_semantics = [], scalar_prefetch = 0 : i64, scratch_operands = 2 : i64, tpu.core_type = #tpu.core_type<tc>} {
    %cst = arith.constant 0.000000e+00 : f32
    %0 = vector.broadcast %cst : f32 to vector<40x4xf32>
    %c0 = arith.constant 0 : index
    %c0_0 = arith.constant 0 : index
    %1 = vector.load %arg7[%c0, %c0_0] : memref<40x4xf32, #tpu.memory_space<vmem>>, vector<40x4xf32>
    tpu.vector_store %arg7[%c0, %c0_0], %0 {strides = array<i32>} : memref<40x4xf32, #tpu.memory_space<vmem>>, vector<40x4xf32>,
    %c0_1 = arith.constant 0 : index
    %c0_2 = arith.constant 0 : index
    %c0_3 = arith.constant 0 : index
    %2 = vector.load %arg0[%c0_1, %c0_2, %c0_3] : memref<2x16x4xf32, #tpu.memory_space<vmem>>, vector<1x16x4xf32>
    %3 = vector.shape_cast %2 : vector<1x16x4xf32> to vector<16x4xf32>
    %c2 = arith.constant 2 : index
    %c0_4 = arith.constant 0 : index
    %4 = vector.load %arg7[%c2, %c0_4] : memref<40x4xf32, #tpu.memory_space<vmem>>, vector<16x4xf32>
    tpu.vector_store %arg7[%c2, %c0_4], %3 {strides = array<i32>} : memref<40x4xf32, #tpu.memory_space<vmem>>, vector<16x4xf32>,
    %c1 = arith.constant 1 : index
    %c0_5 = arith.constant 0 : index
    %c0_6 = arith.constant 0 : index
    %5 = vector.load %arg0[%c1, %c0_5, %c0_6] : memref<2x16x4xf32, #tpu.memory_space<vmem>>, vector<1x16x4xf32>
    %6 = vector.shape_cast %5 : vector<1x16x4xf32> to vector<16x4xf32>
    %c22 = arith.constant 22 : index
    %c0_7 = arith.constant 0 : index
    %7 = vector.load %arg7[%c22, %c0_7] : memref<40x4xf32, #tpu.memory_space<vmem>>, vector<16x4xf32>
    tpu.vector_store %arg7[%c22, %c0_7], %6 {strides = array<i32>} : memref<40x4xf32, #tpu.memory_space<vmem>>, vector<16x4xf32>,
    %c0_8 = arith.constant 0 : index
    %c0_9 = arith.constant 0 : index
    %8 = vector.load %arg7[%c0_8, %c0_9] : memref<40x4xf32, #tpu.memory_space<vmem>>, vector<16x4xf32>
    %c20 = arith.constant 20 : index
    %c0_10 = arith.constant 0 : index
    %9 = vector.load %arg7[%c20, %c0_10] : memref<40x4xf32, #tpu.memory_space<vmem>>, vector<16x4xf32>
    %10 = tpu.concatenate %8, %9 in 0 : vector<16x4xf32>, vector<16x4xf32> -> vector<32x4xf32>
    %c0_11 = arith.constant 0 : index
    %c0_12 = arith.constant 0 : index
    %c0_13 = arith.constant 0 : index
    %11 = vector.load %arg1[%c0_11, %c0_12, %c0_13] : memref<5x4x8xf32, #tpu.memory_space<vmem>>, vector<1x4x8xf32>
    %12 = vector.shape_cast %11 : vector<1x4x8xf32> to vector<4x8xf32>
    %cst_14 = arith.constant dense<0.000000e+00> : vector<32x8xf32>
    %13 = tpu.matmul %10, %12, %cst_14 {dimension_numbers = #tpu.dot_dimension_numbers<[1], [0], [0], [1], [0, 0, 1, 1], [], []>} : vector<32x4xf32>, vector<4x8xf32>, vector<32x8xf32> -> vector<32x8xf32>
    %c1_15 = arith.constant 1 : index
    %c0_16 = arith.constant 0 : index
    %14 = vector.load %arg7[%c1_15, %c0_16] : memref<40x4xf32, #tpu.memory_space<vmem>>, vector<16x4xf32>
    %c21 = arith.constant 21 : index
    %c0_17 = arith.constant 0 : index
    %15 = vector.load %arg7[%c21, %c0_17] : memref<40x4xf32, #tpu.memory_space<vmem>>, vector<16x4xf32>
    %16 = tpu.concatenate %14, %15 in 0 : vector<16x4xf32>, vector<16x4xf32> -> vector<32x4xf32>
    %c1_18 = arith.constant 1 : index
    %c0_19 = arith.constant 0 : index
    %c0_20 = arith.constant 0 : index
    %17 = vector.load %arg1[%c1_18, %c0_19, %c0_20] : memref<5x4x8xf32, #tpu.memory_space<vmem>>, vector<1x4x8xf32>
    %18 = vector.shape_cast %17 : vector<1x4x8xf32> to vector<4x8xf32>
    %cst_21 = arith.constant dense<0.000000e+00> : vector<32x8xf32>
    %19 = tpu.matmul %16, %18, %cst_21 {dimension_numbers = #tpu.dot_dimension_numbers<[1], [0], [0], [1], [0, 0, 1, 1], [], []>} : vector<32x4xf32>, vector<4x8xf32>, vector<32x8xf32> -> vector<32x8xf32>
    %20 = arith.addf %13, %19 : vector<32x8xf32>
    %c2_22 = arith.constant 2 : index
    %c0_23 = arith.constant 0 : index
    %21 = vector.load %arg7[%c2_22, %c0_23] : memref<40x4xf32, #tpu.memory_space<vmem>>, vector<16x4xf32>
    %c22_24 = arith.constant 22 : index
    %c0_25 = arith.constant 0 : index
    %22 = vector.load %arg7[%c22_24, %c0_25] : memref<40x4xf32, #tpu.memory_space<vmem>>, vector<16x4xf32>
    %23 = tpu.concatenate %21, %22 in 0 : vector<16x4xf32>, vector<16x4xf32> -> vector<32x4xf32>
    %c2_26 = arith.constant 2 : index
    %c0_27 = arith.constant 0 : index
    %c0_28 = arith.constant 0 : index
    %24 = vector.load %arg1[%c2_26, %c0_27, %c0_28] : memref<5x4x8xf32, #tpu.memory_space<vmem>>, vector<1x4x8xf32>
    %25 = vector.shape_cast %24 : vector<1x4x8xf32> to vector<4x8xf32>
    %cst_29 = arith.constant dense<0.000000e+00> : vector<32x8xf32>
    %26 = tpu.matmul %23, %25, %cst_29 {dimension_numbers = #tpu.dot_dimension_numbers<[1], [0], [0], [1], [0, 0, 1, 1], [], []>} : vector<32x4xf32>, vector<4x8xf32>, vector<32x8xf32> -> vector<32x8xf32>
    %27 = arith.addf %20, %26 : vector<32x8xf32>
    %c3 = arith.constant 3 : index
    %c0_30 = arith.constant 0 : index
    %28 = vector.load %arg7[%c3, %c0_30] : memref<40x4xf32, #tpu.memory_space<vmem>>, vector<16x4xf32>
    %c23 = arith.constant 23 : index
    %c0_31 = arith.constant 0 : index
    %29 = vector.load %arg7[%c23, %c0_31] : memref<40x4xf32, #tpu.memory_space<vmem>>, vector<16x4xf32>
    %30 = tpu.concatenate %28, %29 in 0 : vector<16x4xf32>, vector<16x4xf32> -> vector<32x4xf32>
    %c3_32 = arith.constant 3 : index
    %c0_33 = arith.constant 0 : index
    %c0_34 = arith.constant 0 : index
    %31 = vector.load %arg1[%c3_32, %c0_33, %c0_34] : memref<5x4x8xf32, #tpu.memory_space<vmem>>, vector<1x4x8xf32>
    %32 = vector.shape_cast %31 : vector<1x4x8xf32> to vector<4x8xf32>
    %cst_35 = arith.constant dense<0.000000e+00> : vector<32x8xf32>
    %33 = tpu.matmul %30, %32, %cst_35 {dimension_numbers = #tpu.dot_dimension_numbers<[1], [0], [0], [1], [0, 0, 1, 1], [], []>} : vector<32x4xf32>, vector<4x8xf32>, vector<32x8xf32> -> vector<32x8xf32>
    %34 = arith.addf %27, %33 : vector<32x8xf32>
    %c4 = arith.constant 4 : index
    %c0_36 = arith.constant 0 : index
    %35 = vector.load %arg7[%c4, %c0_36] : memref<40x4xf32, #tpu.memory_space<vmem>>, vector<16x4xf32>
    %c24 = arith.constant 24 : index
    %c0_37 = arith.constant 0 : index
    %36 = vector.load %arg7[%c24, %c0_37] : memref<40x4xf32, #tpu.memory_space<vmem>>, vector<16x4xf32>
    %37 = tpu.concatenate %35, %36 in 0 : vector<16x4xf32>, vector<16x4xf32> -> vector<32x4xf32>
    %c4_38 = arith.constant 4 : index
    %c0_39 = arith.constant 0 : index
    %c0_40 = arith.constant 0 : index
    %38 = vector.load %arg1[%c4_38, %c0_39, %c0_40] : memref<5x4x8xf32, #tpu.memory_space<vmem>>, vector<1x4x8xf32>
    %39 = vector.shape_cast %38 : vector<1x4x8xf32> to vector<4x8xf32>
    %cst_41 = arith.constant dense<0.000000e+00> : vector<32x8xf32>
    %40 = tpu.matmul %37, %39, %cst_41 {dimension_numbers = #tpu.dot_dimension_numbers<[1], [0], [0], [1], [0, 0, 1, 1], [], []>} : vector<32x4xf32>, vector<4x8xf32>, vector<32x8xf32> -> vector<32x8xf32>
    %41 = arith.addf %34, %40 : vector<32x8xf32>
    %c0_42 = arith.constant 0 : index
    %c0_43 = arith.constant 0 : index
    %42 = vector.load %arg3[%c0_42, %c0_43] : memref<1x8xf32, #tpu.memory_space<vmem>>, vector<1x8xf32>
    %43 = vector.broadcast %42 : vector<1x8xf32> to vector<32x8xf32>
    %44 = arith.addf %41, %43 : vector<32x8xf32>
    %cst_44 = arith.constant 0.000000e+00 : f32
    %45 = vector.broadcast %cst_44 : f32 to vector<36x8xf32>
    %c0_45 = arith.constant 0 : index
    %c0_46 = arith.constant 0 : index
    %46 = vector.load %arg8[%c0_45, %c0_46] : memref<36x8xf32, #tpu.memory_space<vmem>>, vector<36x8xf32>
    tpu.vector_store %arg8[%c0_45, %c0_46], %45 {strides = array<i32>} : memref<36x8xf32, #tpu.memory_space<vmem>>, vector<36x8xf32>,
    %47 = vector.extract_strided_slice %44 {offsets = [0, 0], sizes = [16, 8], strides = [1, 1]} : vector<32x8xf32> to vector<16x8xf32>
    %c1_47 = arith.constant 1 : index
    %c0_48 = arith.constant 0 : index
    %48 = vector.load %arg8[%c1_47, %c0_48] : memref<36x8xf32, #tpu.memory_space<vmem>>, vector<16x8xf32>
    tpu.vector_store %arg8[%c1_47, %c0_48], %47 {strides = array<i32>} : memref<36x8xf32, #tpu.memory_space<vmem>>, vector<16x8xf32>,
    %49 = vector.extract_strided_slice %44 {offsets = [16, 0], sizes = [16, 8], strides = [1, 1]} : vector<32x8xf32> to vector<16x8xf32>
    %c19 = arith.constant 19 : index
    %c0_49 = arith.constant 0 : index
    %50 = vector.load %arg8[%c19, %c0_49] : memref<36x8xf32, #tpu.memory_space<vmem>>, vector<16x8xf32>
    tpu.vector_store %arg8[%c19, %c0_49], %49 {strides = array<i32>} : memref<36x8xf32, #tpu.memory_space<vmem>>, vector<16x8xf32>,
    %c0_50 = arith.constant 0 : index
    %c0_51 = arith.constant 0 : index
    %51 = tpu.strided_load %arg8[%c0_50, %c0_51] {strides = array<i32: 2, 1>} : memref<36x8xf32, #tpu.memory_space<vmem>>, vector<8x8xf32>
    %c18 = arith.constant 18 : index
    %c0_52 = arith.constant 0 : index
    %52 = tpu.strided_load %arg8[%c18, %c0_52] {strides = array<i32: 2, 1>} : memref<36x8xf32, #tpu.memory_space<vmem>>, vector<8x8xf32>
    %53 = tpu.concatenate %51, %52 in 0 : vector<8x8xf32>, vector<8x8xf32> -> vector<16x8xf32>
    %c0_53 = arith.constant 0 : index
    %c0_54 = arith.constant 0 : index
    %c0_55 = arith.constant 0 : index
    %54 = vector.load %arg2[%c0_53, %c0_54, %c0_55] : memref<3x8x32xf32, #tpu.memory_space<vmem>>, vector<1x8x32xf32>
    %55 = vector.shape_cast %54 : vector<1x8x32xf32> to vector<8x32xf32>
    %cst_56 = arith.constant dense<0.000000e+00> : vector<16x32xf32>
    %56 = tpu.matmul %53, %55, %cst_56 {dimension_numbers = #tpu.dot_dimension_numbers<[1], [0], [0], [1], [0, 0, 1, 1], [], []>} : vector<16x8xf32>, vector<8x32xf32>, vector<16x32xf32> -> vector<16x32xf32>
    %c1_57 = arith.constant 1 : index
    %c0_58 = arith.constant 0 : index
    %57 = tpu.strided_load %arg8[%c1_57, %c0_58] {strides = array<i32: 2, 1>} : memref<36x8xf32, #tpu.memory_space<vmem>>, vector<8x8xf32>
    %c19_59 = arith.constant 19 : index
    %c0_60 = arith.constant 0 : index
    %58 = tpu.strided_load %arg8[%c19_59, %c0_60] {strides = array<i32: 2, 1>} : memref<36x8xf32, #tpu.memory_space<vmem>>, vector<8x8xf32>
    %59 = tpu.concatenate %57, %58 in 0 : vector<8x8xf32>, vector<8x8xf32> -> vector<16x8xf32>
    %c1_61 = arith.constant 1 : index
    %c0_62 = arith.constant 0 : index
    %c0_63 = arith.constant 0 : index
    %60 = vector.load %arg2[%c1_61, %c0_62, %c0_63] : memref<3x8x32xf32, #tpu.memory_space<vmem>>, vector<1x8x32xf32>
    %61 = vector.shape_cast %60 : vector<1x8x32xf32> to vector<8x32xf32>
    %cst_64 = arith.constant dense<0.000000e+00> : vector<16x32xf32>
    %62 = tpu.matmul %59, %61, %cst_64 {dimension_numbers = #tpu.dot_dimension_numbers<[1], [0], [0], [1], [0, 0, 1, 1], [], []>} : vector<16x8xf32>, vector<8x32xf32>, vector<16x32xf32> -> vector<16x32xf32>
    %63 = arith.addf %56, %62 : vector<16x32xf32>
    %c2_65 = arith.constant 2 : index
    %c0_66 = arith.constant 0 : index
    %64 = tpu.strided_load %arg8[%c2_65, %c0_66] {strides = array<i32: 2, 1>} : memref<36x8xf32, #tpu.memory_space<vmem>>, vector<8x8xf32>
    %c20_67 = arith.constant 20 : index
    %c0_68 = arith.constant 0 : index
    %65 = tpu.strided_load %arg8[%c20_67, %c0_68] {strides = array<i32: 2, 1>} : memref<36x8xf32, #tpu.memory_space<vmem>>, vector<8x8xf32>
    %66 = tpu.concatenate %64, %65 in 0 : vector<8x8xf32>, vector<8x8xf32> -> vector<16x8xf32>
    %c2_69 = arith.constant 2 : index
    %c0_70 = arith.constant 0 : index
    %c0_71 = arith.constant 0 : index
    %67 = vector.load %arg2[%c2_69, %c0_70, %c0_71] : memref<3x8x32xf32, #tpu.memory_space<vmem>>, vector<1x8x32xf32>
    %68 = vector.shape_cast %67 : vector<1x8x32xf32> to vector<8x32xf32>
    %cst_72 = arith.constant dense<0.000000e+00> : vector<16x32xf32>
    %69 = tpu.matmul %66, %68, %cst_72 {dimension_numbers = #tpu.dot_dimension_numbers<[1], [0], [0], [1], [0, 0, 1, 1], [], []>} : vector<16x8xf32>, vector<8x32xf32>, vector<16x32xf32> -> vector<16x32xf32>
    %70 = arith.addf %63, %69 : vector<16x32xf32>
    %cst_73 = arith.constant dense<0.000000e+00> : vector<32xf32>
    %71 = vector.multi_reduction <add>, %70, %cst_73 [0] : vector<16x32xf32> to vector<32xf32>
    %72 = vector.shape_cast %71 : vector<32xf32> to vector<1x32xf32>
    %cst_74 = arith.constant 1.600000e+01 : f32
    %73 = vector.broadcast %cst_74 : f32 to vector<1x32xf32>
    %74 = arith.divf %72, %73 : vector<1x32xf32>
    %75 = vector.broadcast %74 : vector<1x32xf32> to vector<16x32xf32>
    %76 = arith.subf %70, %75 : vector<16x32xf32>
    %77 = arith.mulf %76, %76 : vector<16x32xf32>
    %cst_75 = arith.constant dense<0.000000e+00> : vector<32xf32>
    %78 = vector.multi_reduction <add>, %77, %cst_75 [0] : vector<16x32xf32> to vector<32xf32>
    %79 = vector.shape_cast %78 : vector<32xf32> to vector<1x32xf32>
    %cst_76 = arith.constant 1.600000e+01 : f32
    %80 = vector.broadcast %cst_76 : f32 to vector<1x32xf32>
    %81 = arith.divf %79, %80 : vector<1x32xf32>
    %cst_77 = arith.constant 9.99999974E-6 : f32
    %82 = vector.broadcast %cst_77 : f32 to vector<1x32xf32>
    %83 = arith.addf %81, %82 : vector<1x32xf32>
    %84 = math.rsqrt %83 : vector<1x32xf32>
    %c0_78 = arith.constant 0 : index
    %c0_79 = arith.constant 0 : index
    %85 = vector.load %arg4[%c0_78, %c0_79] : memref<1x32xf32, #tpu.memory_space<vmem>>, vector<1x32xf32>
    %86 = arith.mulf %84, %85 : vector<1x32xf32>
    %87 = vector.broadcast %86 : vector<1x32xf32> to vector<16x32xf32>
    %88 = arith.mulf %76, %87 : vector<16x32xf32>
    %c0_80 = arith.constant 0 : index
    %c0_81 = arith.constant 0 : index
    %89 = vector.load %arg5[%c0_80, %c0_81] : memref<1x32xf32, #tpu.memory_space<vmem>>, vector<1x32xf32>
    %90 = vector.broadcast %89 : vector<1x32xf32> to vector<16x32xf32>
    %91 = arith.addf %88, %90 : vector<16x32xf32>
    %c0_82 = arith.constant 0 : index
    %c0_83 = arith.constant 0 : index
    %92 = vector.load %arg6[%c0_82, %c0_83] : memref<16x32xf32, #tpu.memory_space<vmem>>, vector<16x32xf32>
    tpu.vector_store %arg6[%c0_82, %c0_83], %91 {strides = array<i32>} : memref<16x32xf32, #tpu.memory_space<vmem>>, vector<16x32xf32>,
    return
  }
}

</mosaic_0001>

<llo_original>
// kernel: tpu_custom_call.1
$region0: #{tpu_custom_call.1}
  #allocation0 [shape = 'u32[]', space=smem, size = 0x4, offset = 0x4, fixed_abs, tag = 'smem constant byte address 0x4 - core index']
  #allocation1 [shape = 'u32[144,128]{1,0:T(1,128)}', space=vmem, size = 0x12000, scoped, tag = 'internal scratch']
  #allocation2 [shape = 'f32[40,4]{1,0:T(8,128)}', space=vmem, size = 0x5000, scoped, tag = 'scratch operand']
  #allocation3 [shape = 'f32[36,8]{1,0:T(8,128)}', space=vmem, size = 0x5000, scoped, tag = 'scratch operand']
  %s0 = inlined_call_operand.vmem [shape: f32[2,16,4], index: 0, kind: input, shape index: {}]
  %s1 = inlined_call_operand.vmem [shape: f32[5,4,8], index: 1, kind: input, shape index: {}]
  %s2 = inlined_call_operand.vmem [shape: f32[3,8,32], index: 2, kind: input, shape index: {}]
  %s3 = inlined_call_operand.vmem [shape: f32[1,8], index: 3, kind: input, shape index: {}]
  %s4 = inlined_call_operand.vmem [shape: f32[1,32], index: 4, kind: input, shape index: {}]
  %s5 = inlined_call_operand.vmem [shape: f32[1,32], index: 5, kind: input, shape index: {}]
  %s6 = inlined_call_operand.hbm [shape: f32[16,32], index: 6, kind: output, shape index: {}]
  %s7 = sld [smem:[#allocation0]]
  $region34: #{tpu_custom_call.1} parent=0
    _
  %s9 = ssub.s32 1, %s7
  %s10 = scalar_select 0, %s9, %s7
  $region1: #{tpu_custom_call.1} parent=0
    #allocation4 [shape = 'u8[8192]{0}', space=vmem, size = 0x2000, scoped, tag = 'output window, operand 0, single buffered']
    #allocation5 [shape = 's32[1]{0}', space=sflag, size = 0x4, scoped, tag = 'scoped memory for tpu_custom_call.1']
    %11 = vsyncpa [#allocation5], 0
    // Predicated region
    $region2: #{tpu_custom_call.1} parent=1 // pred_check
      _
    $region3: #{tpu_custom_call.1} parent=1 // pred_check_branch
      %13 = sbr.rel (0) target = $region5
    $region4: #{tpu_custom_call.1} parent=1 // pred_region
      _
    $region5: #{tpu_custom_call.1} parent=1 // pred_fallthru
      _
    // Predicated region
    $region6: #{tpu_custom_call.1} parent=1 // pred_check
      _
    $region7: #{tpu_custom_call.1} parent=1 // pred_check_branch
      %15 = sbr.rel (0) target = $region9
    $region8: #{tpu_custom_call.1} parent=1 // pred_region
      _
    $region9: #{tpu_custom_call.1} parent=1 // pred_fallthru
      _
    // Predicated region
    $region10: #{tpu_custom_call.1} parent=1 // pred_check
      _
    $region11: #{tpu_custom_call.1} parent=1 // pred_check_branch
      %17 = sbr.rel (0) target = $region13
    $region12: #{tpu_custom_call.1} parent=1 // pred_region
      _
    $region13: #{tpu_custom_call.1} parent=1 // pred_fallthru
      _
    // Predicated region
    $region14: #{tpu_custom_call.1} parent=1 // pred_check
      _
    $region15: #{tpu_custom_call.1} parent=1 // pred_check_branch
      %19 = sbr.rel (0) target = $region17
    $region16: #{tpu_custom_call.1} parent=1 // pred_region
      _
    $region17: #{tpu_custom_call.1} parent=1 // pred_fallthru
      _
    // Predicated region
    $region18: #{tpu_custom_call.1} parent=1 // pred_check
      _
    $region19: #{tpu_custom_call.1} parent=1 // pred_check_branch
      %21 = sbr.rel (0) target = $region21
    $region20: #{tpu_custom_call.1} parent=1 // pred_region
      _
    $region21: #{tpu_custom_call.1} parent=1 // pred_fallthru
      _
    // Predicated region
    $region22: #{tpu_custom_call.1} parent=1 // pred_check
      _
    $region23: #{tpu_custom_call.1} parent=1 // pred_check_branch
      %23 = sbr.rel (0) target = $region25
    $region24: #{tpu_custom_call.1} parent=1 // pred_region
      _
    $region25: #{tpu_custom_call.1} parent=1 // pred_fallthru
      _
    %vm24 = vcmask 31744
    %25 = vst.msk [vmem:[#allocation2] sm:$0xff] %vm24, 0.0
    %26 = vst.msk [vmem:[#allocation2 + $0x8] sm:$0xff] %vm24, 0.0
    %27 = vst.msk [vmem:[#allocation2 + $0x10] sm:$0xff] %vm24, 0.0
    %28 = vst.msk [vmem:[#allocation2 + $0x18] sm:$0xff] %vm24, 0.0
    %29 = vst.msk [vmem:[#allocation2 + $0x20] sm:$0xff] %vm24, 0.0
    %v30 = vld [vmem:[%s0] sm:$0xff]
    %v31 = vld [vmem:[%s0 + $0x8] sm:$0xff]
    %32 = vst.msk [vmem:[#allocation2 + $0x2] sm:$0xff] %vm24, %v30
    %33 = vst.msk [vmem:[#allocation2 + $0xa] sm:$0xff] %vm24, %v31
    %s34 = scalar_lea.vmem %s0, 16
    %v35 = vld [vmem:[%s34] sm:$0xff]
    %v36 = vld [vmem:[%s34 + $0x8] sm:$0xff]
    %37 = vst.msk [vmem:[#allocation2 + $0x16] sm:$0xff] %vm24, %v35
    %38 = vst.msk [vmem:[#allocation2 + $0x1e] sm:$0xff] %vm24, %v36
    %v39 = vld [vmem:[#allocation2] sm:$0xff]
    %v40 = vld [vmem:[#allocation2 + $0x8] sm:$0xff]
    %v41 = vld [vmem:[#allocation2 + $0x14] sm:$0xff]
    %v42 = vld [vmem:[#allocation2 + $0x1c] sm:$0xff]
    %v43 = vld [vmem:[%s1] sm:$0xf]
    %v44 = vld [vmem:[#allocation2 + $0x1] sm:$0xff]
    %v45 = vld [vmem:[#allocation2 + $0x9] sm:$0xff]
    %v46 = vld [vmem:[#allocation2 + $0x15] sm:$0xff]
    %v47 = vld [vmem:[#allocation2 + $0x1d] sm:$0xff]
    %s48 = scalar_lea.vmem %s1, 4
    %v49 = vld [vmem:[%s48] sm:$0xf]
    %v51 = vsel %vm24, %v44, 0
    %v54 = vsel %vm24, %v45, 0
    %v57 = vsel %vm24, %v46, 0
    %v60 = vsel %vm24, %v47, 0
    %vm62 = vcmask 1043456
    %v64 = vsel %vm62, %v49, 0
    %66 = vmatprep.subr.mxu0 0.0
    %67 = vmatpush1.msra.mxu0 %v64
    %68 = vmatprep.subr.mxu0 0.0
    %69 = vmatpush1.msra.mxu0 0.0
    %70 = vmatprep.subr.mxu0 0.0
    %71 = vmatpush1.msra.mxu0 0.0
    %72 = vmatprep.subr.mxu0 0.0
    %73 = vmatpush1.msra.mxu0 0.0
    %74 = vmatprep.subr.mxu0 0.0
    %75 = vmatpush1.msra.mxu0 0.0
    %76 = vmatprep.subr.mxu0 0.0
    %77 = vmatpush1.msra.mxu0 0.0
    %78 = vmatprep.subr.mxu0 0.0
    %79 = vmatpush1.msra.mxu0 0.0
    %80 = vmatprep.subr.mxu0 0.0
    %81 = vmatpush1.msra.mxu0 0.0
    %82 = vmatprep.subr.mxu0 0.0
    %83 = vmatpush1.msra.mxu0 0.0
    %84 = vmatprep.subr.mxu0 0.0
    %85 = vmatpush1.msra.mxu0 0.0
    %86 = vmatprep.subr.mxu0 0.0
    %87 = vmatpush1.msra.mxu0 0.0
    %88 = vmatprep.subr.mxu0 0.0
    %89 = vmatpush1.msra.mxu0 0.0
    %90 = vmatprep.subr.mxu0 0.0
    %91 = vmatpush1.msra.mxu0 0.0
    %92 = vmatprep.subr.mxu0 0.0
    %93 = vmatpush1.msra.mxu0 0.0
    %94 = vmatprep.subr.mxu0 0.0
    %95 = vmatpush1.msra.mxu0 0.0
    %96 = vmatprep.subr.mxu0 0.0
    %97 = vmatpush1.msra.mxu0 0.0
    %98 = vmatprep.subr.mxu0 0.0
    %99 = vmatpush1.msra.mxu0 0.0
    %100 = vmatprep.subr.mxu0 0.0
    %101 = vmatpush1.msra.mxu0 0.0
    %102 = vmatprep.subr.mxu0 0.0
    %103 = vmatpush1.msra.mxu0 0.0
    %104 = vmatprep.subr.mxu0 0.0
    %105 = vmatpush1.msra.mxu0 0.0
    %106 = vmatprep.subr.mxu0 0.0
    %107 = vmatpush1.msra.mxu0 0.0
    %108 = vmatprep.subr.mxu0 0.0
    %109 = vmatpush1.msra.mxu0 0.0
    %110 = vmatprep.subr.mxu0 0.0
    %111 = vmatpush1.msra.mxu0 0.0
    %112 = vmatprep.subr.mxu0 0.0
    %113 = vmatpush1.msra.mxu0 0.0
    %114 = vmatprep.subr.mxu0 0.0
    %115 = vmatpush1.msra.mxu0 0.0
    %116 = vmatprep.subr.mxu0 0.0
    %117 = vmatpush1.msra.mxu0 0.0
    %118 = vmatprep.subr.mxu0 0.0
    %119 = vmatpush1.msra.mxu0 0.0
    %120 = vmatprep.subr.mxu0 0.0
    %121 = vmatpush1.msra.mxu0 0.0
    %122 = vmatprep.subr.mxu0 0.0
    %123 = vmatpush1.msra.mxu0 0.0
    %124 = vmatprep.subr.mxu0 0.0
    %125 = vmatpush1.msra.mxu0 0.0
    %126 = vmatprep.subr.mxu0 0.0
    %127 = vmatpush1.msra.mxu0 0.0
    %128 = vmatprep.subr.mxu0 0.0
    %129 = vmatpush1.msra.mxu0 0.0
    %130 = vmatprep.mubr.f32.mxu0 0.0
    %131 = vmatmul.mubr.f32.gmra.mrb[0].mxu0 %v51
    %v132 = vpop.f32.mrb[0].mxu0
    %v133 = vadd.f32 0.0, %v132
    %v134 = vpop.f32.mrb[0].mxu0
    %135 = vmatprep.mubr.f32.mxu0 0.0
    %136 = vmatmul.mubr.f32.gmra.mrb[0].mxu0 %v54
    %v137 = vpop.f32.mrb[0].mxu0
    %v138 = vadd.f32 0.0, %v137
    %v139 = vpop.f32.mrb[0].mxu0
    %140 = vmatprep.mubr.f32.mxu0 0.0
    %141 = vmatmul.mubr.f32.gmra.mrb[0].mxu0 %v57
    %v142 = vpop.f32.mrb[0].mxu0
    %v143 = vadd.f32 0.0, %v142
    %v144 = vpop.f32.mrb[0].mxu0
    %145 = vmatprep.mubr.f32.mxu0 0.0
    %146 = vmatmul.mubr.f32.gmra.mrb[0].mxu0 %v60
    %v147 = vpop.f32.mrb[0].mxu0
    %v148 = vadd.f32 0.0, %v147
    %v149 = vpop.f32.mrb[0].mxu0
    %150 = vdwg.mxu0
    %v152 = vsel %vm24, %v39, 0
    %v155 = vsel %vm24, %v40, 0
    %v158 = vsel %vm24, %v41, 0
    %v161 = vsel %vm24, %v42, 0
    %v164 = vsel %vm62, %v43, 0
    %166 = vmatprep.subr.mxu0 0.0
    %167 = vmatpush1.msra.mxu0 %v164
    %168 = vmatprep.subr.mxu0 0.0
    %169 = vmatpush1.msra.mxu0 0.0
    %170 = vmatprep.subr.mxu0 0.0
    %171 = vmatpush1.msra.mxu0 0.0
    %172 = vmatprep.subr.mxu0 0.0
    %173 = vmatpush1.msra.mxu0 0.0
    %174 = vmatprep.subr.mxu0 0.0
    %175 = vmatpush1.msra.mxu0 0.0
    %176 = vmatprep.subr.mxu0 0.0
    %177 = vmatpush1.msra.mxu0 0.0
    %178 = vmatprep.subr.mxu0 0.0
    %179 = vmatpush1.msra.mxu0 0.0
    %180 = vmatprep.subr.mxu0 0.0
    %181 = vmatpush1.msra.mxu0 0.0
    %182 = vmatprep.subr.mxu0 0.0
    %183 = vmatpush1.msra.mxu0 0.0
    %184 = vmatprep.subr.mxu0 0.0
    %185 = vmatpush1.msra.mxu0 0.0
    %186 = vmatprep.subr.mxu0 0.0
    %187 = vmatpush1.msra.mxu0 0.0
    %188 = vmatprep.subr.mxu0 0.0
    %189 = vmatpush1.msra.mxu0 0.0
    %190 = vmatprep.subr.mxu0 0.0
    %191 = vmatpush1.msra.mxu0 0.0
    %192 = vmatprep.subr.mxu0 0.0
    %193 = vmatpush1.msra.mxu0 0.0
    %194 = vmatprep.subr.mxu0 0.0
    %195 = vmatpush1.msra.mxu0 0.0
    %196 = vmatprep.subr.mxu0 0.0
    %197 = vmatpush1.msra.mxu0 0.0
    %198 = vmatprep.subr.mxu0 0.0
    %199 = vmatpush1.msra.mxu0 0.0
    %200 = vmatprep.subr.mxu0 0.0
    %201 = vmatpush1.msra.mxu0 0.0
    %202 = vmatprep.subr.mxu0 0.0
    %203 = vmatpush1.msra.mxu0 0.0
    %204 = vmatprep.subr.mxu0 0.0
    %205 = vmatpush1.msra.mxu0 0.0
    %206 = vmatprep.subr.mxu0 0.0
    %207 = vmatpush1.msra.mxu0 0.0
    %208 = vmatprep.subr.mxu0 0.0
    %209 = vmatpush1.msra.mxu0 0.0
    %210 = vmatprep.subr.mxu0 0.0
    %211 = vmatpush1.msra.mxu0 0.0
    %212 = vmatprep.subr.mxu0 0.0
    %213 = vmatpush1.msra.mxu0 0.0
    %214 = vmatprep.subr.mxu0 0.0
    %215 = vmatpush1.msra.mxu0 0.0
    %216 = vmatprep.subr.mxu0 0.0
    %217 = vmatpush1.msra.mxu0 0.0
    %218 = vmatprep.subr.mxu0 0.0
    %219 = vmatpush1.msra.mxu0 0.0
    %220 = vmatprep.subr.mxu0 0.0
    %221 = vmatpush1.msra.mxu0 0.0
    %222 = vmatprep.subr.mxu0 0.0
    %223 = vmatpush1.msra.mxu0 0.0
    %224 = vmatprep.subr.mxu0 0.0
    %225 = vmatpush1.msra.mxu0 0.0
    %226 = vmatprep.subr.mxu0 0.0
    %227 = vmatpush1.msra.mxu0 0.0
    %228 = vmatprep.subr.mxu0 0.0
    %229 = vmatpush1.msra.mxu0 0.0
    %230 = vmatprep.mubr.f32.mxu0 0.0
    %231 = vmatmul.mubr.f32.gmra.mrb[0].mxu0 %v152
    %v232 = vpop.f32.mrb[0].mxu0
    %v233 = vadd.f32 %v133, %v232
    %v234 = vpop.f32.mrb[0].mxu0
    %235 = vmatprep.mubr.f32.mxu0 0.0
    %236 = vmatmul.mubr.f32.gmra.mrb[0].mxu0 %v155
    %v237 = vpop.f32.mrb[0].mxu0
    %v238 = vadd.f32 %v138, %v237
    %v239 = vpop.f32.mrb[0].mxu0
    %240 = vmatprep.mubr.f32.mxu0 0.0
    %241 = vmatmul.mubr.f32.gmra.mrb[0].mxu0 %v158
    %v242 = vpop.f32.mrb[0].mxu0
    %v243 = vadd.f32 %v143, %v242
    %v244 = vpop.f32.mrb[0].mxu0
    %245 = vmatprep.mubr.f32.mxu0 0.0
    %246 = vmatmul.mubr.f32.gmra.mrb[0].mxu0 %v161
    %v247 = vpop.f32.mrb[0].mxu0
    %v248 = vadd.f32 %v148, %v247
    %v249 = vpop.f32.mrb[0].mxu0
    %250 = vdwg.mxu0
    %v251 = vld [vmem:[#allocation2 + $0x2] sm:$0xff]
    %v252 = vld [vmem:[#allocation2 + $0xa] sm:$0xff]
    %v253 = vld [vmem:[#allocation2 + $0x16] sm:$0xff]
    %v254 = vld [vmem:[#allocation2 + $0x1e] sm:$0xff]
    %s255 = scalar_lea.vmem %s1, 8
    %v256 = vld [vmem:[%s255] sm:$0xf]
    %v258 = vsel %vm24, %v251, 0
    %v261 = vsel %vm24, %v252, 0
    %v264 = vsel %vm24, %v253, 0
    %v267 = vsel %vm24, %v254, 0
    %v270 = vsel %vm62, %v256, 0
    %272 = vmatprep.subr.mxu0 0.0
    %273 = vmatpush1.msra.mxu0 %v270
    %274 = vmatprep.subr.mxu0 0.0
    %275 = vmatpush1.msra.mxu0 0.0
    %276 = vmatprep.subr.mxu0 0.0
    %277 = vmatpush1.msra.mxu0 0.0
    %278 = vmatprep.subr.mxu0 0.0
    %279 = vmatpush1.msra.mxu0 0.0
    %280 = vmatprep.subr.mxu0 0.0
    %281 = vmatpush1.msra.mxu0 0.0
    %282 = vmatprep.subr.mxu0 0.0
    %283 = vmatpush1.msra.mxu0 0.0
    %284 = vmatprep.subr.mxu0 0.0
    %285 = vmatpush1.msra.mxu0 0.0
    %286 = vmatprep.subr.mxu0 0.0
    %287 = vmatpush1.msra.mxu0 0.0
    %288 = vmatprep.subr.mxu0 0.0
    %289 = vmatpush1.msra.mxu0 0.0
    %290 = vmatprep.subr.mxu0 0.0
    %291 = vmatpush1.msra.mxu0 0.0
    %292 = vmatprep.subr.mxu0 0.0
    %293 = vmatpush1.msra.mxu0 0.0
    %294 = vmatprep.subr.mxu0 0.0
    %295 = vmatpush1.msra.mxu0 0.0
    %296 = vmatprep.subr.mxu0 0.0
    %297 = vmatpush1.msra.mxu0 0.0
    %298 = vmatprep.subr.mxu0 0.0
    %299 = vmatpush1.msra.mxu0 0.0
    %300 = vmatprep.subr.mxu0 0.0
    %301 = vmatpush1.msra.mxu0 0.0
    %302 = vmatprep.subr.mxu0 0.0
    %303 = vmatpush1.msra.mxu0 0.0
    %304 = vmatprep.subr.mxu0 0.0
    %305 = vmatpush1.msra.mxu0 0.0
    %306 = vmatprep.subr.mxu0 0.0
    %307 = vmatpush1.msra.mxu0 0.0
    %308 = vmatprep.subr.mxu0 0.0
    %309 = vmatpush1.msra.mxu0 0.0
    %310 = vmatprep.subr.mxu0 0.0
    %311 = vmatpush1.msra.mxu0 0.0
    %312 = vmatprep.subr.mxu0 0.0
    %313 = vmatpush1.msra.mxu0 0.0
    %314 = vmatprep.subr.mxu0 0.0
    %315 = vmatpush1.msra.mxu0 0.0
    %316 = vmatprep.subr.mxu0 0.0
    %317 = vmatpush1.msra.mxu0 0.0
    %318 = vmatprep.subr.mxu0 0.0
    %319 = vmatpush1.msra.mxu0 0.0
    %320 = vmatprep.subr.mxu0 0.0
    %321 = vmatpush1.msra.mxu0 0.0
    %322 = vmatprep.subr.mxu0 0.0
    %323 = vmatpush1.msra.mxu0 0.0
    %324 = vmatprep.subr.mxu0 0.0
    %325 = vmatpush1.msra.mxu0 0.0
    %326 = vmatprep.subr.mxu0 0.0
    %327 = vmatpush1.msra.mxu0 0.0
    %328 = vmatprep.subr.mxu0 0.0
    %329 = vmatpush1.msra.mxu0 0.0
    %330 = vmatprep.subr.mxu0 0.0
    %331 = vmatpush1.msra.mxu0 0.0
    %332 = vmatprep.subr.mxu0 0.0
    %333 = vmatpush1.msra.mxu0 0.0
    %334 = vmatprep.subr.mxu0 0.0
    %335 = vmatpush1.msra.mxu0 0.0
    %336 = vmatprep.mubr.f32.mxu0 0.0
    %337 = vmatmul.mubr.f32.gmra.mrb[0].mxu0 %v258
    %v338 = vpop.f32.mrb[0].mxu0
    %v339 = vadd.f32 0.0, %v338
    %v340 = vpop.f32.mrb[0].mxu0
    %341 = vmatprep.mubr.f32.mxu0 0.0
    %342 = vmatmul.mubr.f32.gmra.mrb[0].mxu0 %v261
    %v343 = vpop.f32.mrb[0].mxu0
    %v344 = vadd.f32 0.0, %v343
    %v345 = vpop.f32.mrb[0].mxu0
    %346 = vmatprep.mubr.f32.mxu0 0.0
    %347 = vmatmul.mubr.f32.gmra.mrb[0].mxu0 %v264
    %v348 = vpop.f32.mrb[0].mxu0
    %v349 = vadd.f32 0.0, %v348
    %v350 = vpop.f32.mrb[0].mxu0
    %351 = vmatprep.mubr.f32.mxu0 0.0
    %352 = vmatmul.mubr.f32.gmra.mrb[0].mxu0 %v267
    %v353 = vpop.f32.mrb[0].mxu0
    %v354 = vadd.f32 0.0, %v353
    %v355 = vpop.f32.mrb[0].mxu0
    %356 = vdwg.mxu0
    %v357 = vadd.f32 %v233, %v339
    %v358 = vadd.f32 %v238, %v344
    %v359 = vadd.f32 %v243, %v349
    %v360 = vadd.f32 %v248, %v354
    %v361 = vld [vmem:[#allocation2 + $0x3] sm:$0xff]
    %v362 = vld [vmem:[#allocation2 + $0xb] sm:$0xff]
    %v363 = vld [vmem:[#allocation2 + $0x17] sm:$0xff]
    %v364 = vld [vmem:[#allocation2 + $0x1f] sm:$0xff]
    %s365 = scalar_lea.vmem %s1, 12
    %v366 = vld [vmem:[%s365] sm:$0xf]
    %v368 = vsel %vm24, %v361, 0
    %v371 = vsel %vm24, %v362, 0
    %v374 = vsel %vm24, %v363, 0
    %v377 = vsel %vm24, %v364, 0
    %v380 = vsel %vm62, %v366, 0
    %382 = vmatprep.subr.mxu0 0.0
    %383 = vmatpush1.msra.mxu0 %v380
    %384 = vmatprep.subr.mxu0 0.0
    %385 = vmatpush1.msra.mxu0 0.0
    %386 = vmatprep.subr.mxu0 0.0
    %387 = vmatpush1.msra.mxu0 0.0
    %388 = vmatprep.subr.mxu0 0.0
    %389 = vmatpush1.msra.mxu0 0.0
    %390 = vmatprep.subr.mxu0 0.0
    %391 = vmatpush1.msra.mxu0 0.0
    %392 = vmatprep.subr.mxu0 0.0
    %393 = vmatpush1.msra.mxu0 0.0
    %394 = vmatprep.subr.mxu0 0.0
    %395 = vmatpush1.msra.mxu0 0.0
    %396 = vmatprep.subr.mxu0 0.0
    %397 = vmatpush1.msra.mxu0 0.0
    %398 = vmatprep.subr.mxu0 0.0
    %399 = vmatpush1.msra.mxu0 0.0
    %400 = vmatprep.subr.mxu0 0.0
    %401 = vmatpush1.msra.mxu0 0.0
    %402 = vmatprep.subr.mxu0 0.0
    %403 = vmatpush1.msra.mxu0 0.0
    %404 = vmatprep.subr.mxu0 0.0
    %405 = vmatpush1.msra.mxu0 0.0
    %406 = vmatprep.subr.mxu0 0.0
    %407 = vmatpush1.msra.mxu0 0.0
    %408 = vmatprep.subr.mxu0 0.0
    %409 = vmatpush1.msra.mxu0 0.0
    %410 = vmatprep.subr.mxu0 0.0
    %411 = vmatpush1.msra.mxu0 0.0
    %412 = vmatprep.subr.mxu0 0.0
    %413 = vmatpush1.msra.mxu0 0.0
    %414 = vmatprep.subr.mxu0 0.0
    %415 = vmatpush1.msra.mxu0 0.0
    %416 = vmatprep.subr.mxu0 0.0
    %417 = vmatpush1.msra.mxu0 0.0
    %418 = vmatprep.subr.mxu0 0.0
    %419 = vmatpush1.msra.mxu0 0.0
    %420 = vmatprep.subr.mxu0 0.0
    %421 = vmatpush1.msra.mxu0 0.0
    %422 = vmatprep.subr.mxu0 0.0
    %423 = vmatpush1.msra.mxu0 0.0
    %424 = vmatprep.subr.mxu0 0.0
    %425 = vmatpush1.msra.mxu0 0.0
    %426 = vmatprep.subr.mxu0 0.0
    %427 = vmatpush1.msra.mxu0 0.0
    %428 = vmatprep.subr.mxu0 0.0
    %429 = vmatpush1.msra.mxu0 0.0
    %430 = vmatprep.subr.mxu0 0.0
    %431 = vmatpush1.msra.mxu0 0.0
    %432 = vmatprep.subr.mxu0 0.0
    %433 = vmatpush1.msra.mxu0 0.0
    %434 = vmatprep.subr.mxu0 0.0
    %435 = vmatpush1.msra.mxu0 0.0
    %436 = vmatprep.subr.mxu0 0.0
    %437 = vmatpush1.msra.mxu0 0.0
    %438 = vmatprep.subr.mxu0 0.0
    %439 = vmatpush1.msra.mxu0 0.0
    %440 = vmatprep.subr.mxu0 0.0
    %441 = vmatpush1.msra.mxu0 0.0
    %442 = vmatprep.subr.mxu0 0.0
    %443 = vmatpush1.msra.mxu0 0.0
    %444 = vmatprep.subr.mxu0 0.0
    %445 = vmatpush1.msra.mxu0 0.0
    %446 = vmatprep.mubr.f32.mxu0 0.0
    %447 = vmatmul.mubr.f32.gmra.mrb[0].mxu0 %v368
    %v448 = vpop.f32.mrb[0].mxu0
    %v449 = vadd.f32 0.0, %v448
    %v450 = vpop.f32.mrb[0].mxu0
    %451 = vmatprep.mubr.f32.mxu0 0.0
    %452 = vmatmul.mubr.f32.gmra.mrb[0].mxu0 %v371
    %v453 = vpop.f32.mrb[0].mxu0
    %v454 = vadd.f32 0.0, %v453
    %v455 = vpop.f32.mrb[0].mxu0
    %456 = vmatprep.mubr.f32.mxu0 0.0
    %457 = vmatmul.mubr.f32.gmra.mrb[0].mxu0 %v374
    %v458 = vpop.f32.mrb[0].mxu0
    %v459 = vadd.f32 0.0, %v458
    %v460 = vpop.f32.mrb[0].mxu0
    %461 = vmatprep.mubr.f32.mxu0 0.0
    %462 = vmatmul.mubr.f32.gmra.mrb[0].mxu0 %v377
    %v463 = vpop.f32.mrb[0].mxu0
    %v464 = vadd.f32 0.0, %v463
    %v465 = vpop.f32.mrb[0].mxu0
    %466 = vdwg.mxu0
    %v467 = vadd.f32 %v357, %v449
    %v468 = vadd.f32 %v358, %v454
    %v469 = vadd.f32 %v359, %v459
    %v470 = vadd.f32 %v360, %v464
    %v471 = vld [vmem:[#allocation2 + $0x4] sm:$0xff]
    %v472 = vld [vmem:[#allocation2 + $0xc] sm:$0xff]
    %v473 = vld [vmem:[#allocation2 + $0x18] sm:$0xff]
    %v474 = vld [vmem:[#allocation2 + $0x20] sm:$0xff]
    %s475 = scalar_lea.vmem %s1, 16
    %v476 = vld [vmem:[%s475] sm:$0xf]
    %v478 = vsel %vm24, %v471, 0
    %v481 = vsel %vm24, %v472, 0
    %v484 = vsel %vm24, %v473, 0
    %v487 = vsel %vm24, %v474, 0
    %v490 = vsel %vm62, %v476, 0
    %492 = vmatprep.subr.mxu0 0.0
    %493 = vmatpush1.msra.mxu0 %v490
    %494 = vmatprep.subr.mxu0 0.0
    %495 = vmatpush1.msra.mxu0 0.0
    %496 = vmatprep.subr.mxu0 0.0
    %497 = vmatpush1.msra.mxu0 0.0
    %498 = vmatprep.subr.mxu0 0.0
    %499 = vmatpush1.msra.mxu0 0.0
    %500 = vmatprep.subr.mxu0 0.0
    %501 = vmatpush1.msra.mxu0 0.0
    %502 = vmatprep.subr.mxu0 0.0
    %503 = vmatpush1.msra.mxu0 0.0
    %504 = vmatprep.subr.mxu0 0.0
    %505 = vmatpush1.msra.mxu0 0.0
    %506 = vmatprep.subr.mxu0 0.0
    %507 = vmatpush1.msra.mxu0 0.0
    %508 = vmatprep.subr.mxu0 0.0
    %509 = vmatpush1.msra.mxu0 0.0
    %510 = vmatprep.subr.mxu0 0.0
    %511 = vmatpush1.msra.mxu0 0.0
    %512 = vmatprep.subr.mxu0 0.0
    %513 = vmatpush1.msra.mxu0 0.0
    %514 = vmatprep.subr.mxu0 0.0
    %515 = vmatpush1.msra.mxu0 0.0
    %516 = vmatprep.subr.mxu0 0.0
    %517 = vmatpush1.msra.mxu0 0.0
    %518 = vmatprep.subr.mxu0 0.0
    %519 = vmatpush1.msra.mxu0 0.0
    %520 = vmatprep.subr.mxu0 0.0
    %521 = vmatpush1.msra.mxu0 0.0
    %522 = vmatprep.subr.mxu0 0.0
    %523 = vmatpush1.msra.mxu0 0.0
    %524 = vmatprep.subr.mxu0 0.0
    %525 = vmatpush1.msra.mxu0 0.0
    %526 = vmatprep.subr.mxu0 0.0
    %527 = vmatpush1.msra.mxu0 0.0
    %528 = vmatprep.subr.mxu0 0.0
    %529 = vmatpush1.msra.mxu0 0.0
    %530 = vmatprep.subr.mxu0 0.0
    %531 = vmatpush1.msra.mxu0 0.0
    %532 = vmatprep.subr.mxu0 0.0
    %533 = vmatpush1.msra.mxu0 0.0
    %534 = vmatprep.subr.mxu0 0.0
    %535 = vmatpush1.msra.mxu0 0.0
    %536 = vmatprep.subr.mxu0 0.0
    %537 = vmatpush1.msra.mxu0 0.0
    %538 = vmatprep.subr.mxu0 0.0
    %539 = vmatpush1.msra.mxu0 0.0
    %540 = vmatprep.subr.mxu0 0.0
    %541 = vmatpush1.msra.mxu0 0.0
    %542 = vmatprep.subr.mxu0 0.0
    %543 = vmatpush1.msra.mxu0 0.0
    %544 = vmatprep.subr.mxu0 0.0
    %545 = vmatpush1.msra.mxu0 0.0
    %546 = vmatprep.subr.mxu0 0.0
    %547 = vmatpush1.msra.mxu0 0.0
    %548 = vmatprep.subr.mxu0 0.0
    %549 = vmatpush1.msra.mxu0 0.0
    %550 = vmatprep.subr.mxu0 0.0
    %551 = vmatpush1.msra.mxu0 0.0
    %552 = vmatprep.subr.mxu0 0.0
    %553 = vmatpush1.msra.mxu0 0.0
    %554 = vmatprep.subr.mxu0 0.0
    %555 = vmatpush1.msra.mxu0 0.0
    %556 = vmatprep.mubr.f32.mxu0 0.0
    %557 = vmatmul.mubr.f32.gmra.mrb[0].mxu0 %v478
    %v558 = vpop.f32.mrb[0].mxu0
    %v559 = vadd.f32 0.0, %v558
    %v560 = vpop.f32.mrb[0].mxu0
    %561 = vmatprep.mubr.f32.mxu0 0.0
    %562 = vmatmul.mubr.f32.gmra.mrb[0].mxu0 %v481
    %v563 = vpop.f32.mrb[0].mxu0
    %v564 = vadd.f32 0.0, %v563
    %v565 = vpop.f32.mrb[0].mxu0
    %566 = vmatprep.mubr.f32.mxu0 0.0
    %567 = vmatmul.mubr.f32.gmra.mrb[0].mxu0 %v484
    %v568 = vpop.f32.mrb[0].mxu0
    %v569 = vadd.f32 0.0, %v568
    %v570 = vpop.f32.mrb[0].mxu0
    %571 = vmatprep.mubr.f32.mxu0 0.0
    %572 = vmatmul.mubr.f32.gmra.mrb[0].mxu0 %v487
    %v573 = vpop.f32.mrb[0].mxu0
    %v574 = vadd.f32 0.0, %v573
    %v575 = vpop.f32.mrb[0].mxu0
    %576 = vdwg.mxu0
    %v577 = vadd.f32 %v467, %v559
    %v578 = vadd.f32 %v468, %v564
    %v579 = vadd.f32 %v469, %v569
    %v580 = vadd.f32 %v470, %v574
    %v581 = vld [vmem:[%s3] sm:$0x1]
    %v583 = vlaneseq
    %v584 = vshrl.u32 %v583, 7
    %v585 = vsub.s32 0, %v584
    %v586 = vrot.slane %v581, %v585
    %v588 = vadd.f32 %v577, %v586
    %v589 = vadd.f32 %v578, %v586
    %v590 = vadd.f32 %v579, %v586
    %v591 = vadd.f32 %v580, %v586
    %vm592 = vcmask 64512
    %593 = vst.msk [vmem:[#allocation3] sm:$0xff] %vm592, 0.0
    %594 = vst.msk [vmem:[#allocation3 + $0x8] sm:$0xff] %vm592, 0.0
    %595 = vst.msk [vmem:[#allocation3 + $0x10] sm:$0xff] %vm592, 0.0
    %596 = vst.msk [vmem:[#allocation3 + $0x18] sm:$0xff] %vm592, 0.0
    %vm597 = vcmask 60416
    %598 = vst.msk [vmem:[#allocation3 + $0x20] sm:$0xf] %vm597, 0.0
    %599 = vst.msk [vmem:[#allocation3 + $0x1] sm:$0xff] %vm592, %v588
    %600 = vst.msk [vmem:[#allocation3 + $0x9] sm:$0xff] %vm592, %v589
    %601 = vst.msk [vmem:[#allocation3 + $0x13] sm:$0xff] %vm592, %v590
    %602 = vst.msk [vmem:[#allocation3 + $0x1b] sm:$0xff] %vm592, %v591
    %v603 = vld [vmem:[#allocation3] ss:$2 sm:$0xff]
    %s604 = scalar_lea.vmem [#allocation3], 18
    %v605 = vld [vmem:[%s604] ss:$2 sm:$0xff]
    %v606 = vld [vmem:[%s2] sm:$0xff]
    %s607 = scalar_lea.vmem [#allocation3], 1
    %v608 = vld [vmem:[%s607] ss:$2 sm:$0xff]
    %s609 = scalar_lea.vmem [#allocation3], 19
    %v610 = vld [vmem:[%s609] ss:$2 sm:$0xff]
    %s611 = scalar_lea.vmem %s2, 8
    %v612 = vld [vmem:[%s611] sm:$0xff]
    %v614 = vsel %vm592, %v608, 0
    %v617 = vsel %vm592, %v610, 0
    %619 = vmatprep.subr.mxu0 0.0
    %620 = vmatpush1.msra.mxu0 %v612
    %621 = vmatprep.subr.mxu0 0.0
    %622 = vmatpush1.msra.mxu0 0.0
    %623 = vmatprep.subr.mxu0 0.0
    %624 = vmatpush1.msra.mxu0 0.0
    %625 = vmatprep.subr.mxu0 0.0
    %626 = vmatpush1.msra.mxu0 0.0
    %627 = vmatprep.subr.mxu0 0.0
    %628 = vmatpush1.msra.mxu0 0.0
    %629 = vmatprep.subr.mxu0 0.0
    %630 = vmatpush1.msra.mxu0 0.0
    %631 = vmatprep.subr.mxu0 0.0
    %632 = vmatpush1.msra.mxu0 0.0
    %633 = vmatprep.subr.mxu0 0.0
    %634 = vmatpush1.msra.mxu0 0.0
    %635 = vmatprep.subr.mxu0 0.0
    %636 = vmatpush1.msra.mxu0 0.0
    %637 = vmatprep.subr.mxu0 0.0
    %638 = vmatpush1.msra.mxu0 0.0
    %639 = vmatprep.subr.mxu0 0.0
    %640 = vmatpush1.msra.mxu0 0.0
    %641 = vmatprep.subr.mxu0 0.0
    %642 = vmatpush1.msra.mxu0 0.0
    %643 = vmatprep.subr.mxu0 0.0
    %644 = vmatpush1.msra.mxu0 0.0
    %645 = vmatprep.subr.mxu0 0.0
    %646 = vmatpush1.msra.mxu0 0.0
    %647 = vmatprep.subr.mxu0 0.0
    %648 = vmatpush1.msra.mxu0 0.0
    %649 = vmatprep.subr.mxu0 0.0
    %650 = vmatpush1.msra.mxu0 0.0
    %651 = vmatprep.subr.mxu0 0.0
    %652 = vmatpush1.msra.mxu0 0.0
    %653 = vmatprep.subr.mxu0 0.0
    %654 = vmatpush1.msra.mxu0 0.0
    %655 = vmatprep.subr.mxu0 0.0
    %656 = vmatpush1.msra.mxu0 0.0
    %657 = vmatprep.subr.mxu0 0.0
    %658 = vmatpush1.msra.mxu0 0.0
    %659 = vmatprep.subr.mxu0 0.0
    %660 = vmatpush1.msra.mxu0 0.0
    %661 = vmatprep.subr.mxu0 0.0
    %662 = vmatpush1.msra.mxu0 0.0
    %663 = vmatprep.subr.mxu0 0.0
    %664 = vmatpush1.msra.mxu0 0.0
    %665 = vmatprep.subr.mxu0 0.0
    %666 = vmatpush1.msra.mxu0 0.0
    %667 = vmatprep.subr.mxu0 0.0
    %668 = vmatpush1.msra.mxu0 0.0
    %669 = vmatprep.subr.mxu0 0.0
    %670 = vmatpush1.msra.mxu0 0.0
    %671 = vmatprep.subr.mxu0 0.0
    %672 = vmatpush1.msra.mxu0 0.0
    %673 = vmatprep.subr.mxu0 0.0
    %674 = vmatpush1.msra.mxu0 0.0
    %675 = vmatprep.subr.mxu0 0.0
    %676 = vmatpush1.msra.mxu0 0.0
    %677 = vmatprep.subr.mxu0 0.0
    %678 = vmatpush1.msra.mxu0 0.0
    %679 = vmatprep.subr.mxu0 0.0
    %680 = vmatpush1.msra.mxu0 0.0
    %681 = vmatprep.subr.mxu0 0.0
    %682 = vmatpush1.msra.mxu0 0.0
    %683 = vmatprep.mubr.f32.mxu0 0.0
    %684 = vmatmul.mubr.f32.gmra.mrb[0].mxu0 %v614
    %v685 = vpop.f32.mrb[0].mxu0
    %v686 = vadd.f32 0.0, %v685
    %v687 = vpop.f32.mrb[0].mxu0
    %688 = vmatprep.mubr.f32.mxu0 0.0
    %689 = vmatmul.mubr.f32.gmra.mrb[0].mxu0 %v617
    %v690 = vpop.f32.mrb[0].mxu0
    %v691 = vadd.f32 0.0, %v690
    %v692 = vpop.f32.mrb[0].mxu0
    %693 = vdwg.mxu0
    %v695 = vsel %vm592, %v603, 0
    %v698 = vsel %vm592, %v605, 0
    %700 = vmatprep.subr.mxu0 0.0
    %701 = vmatpush1.msra.mxu0 %v606
    %702 = vmatprep.subr.mxu0 0.0
    %703 = vmatpush1.msra.mxu0 0.0
    %704 = vmatprep.subr.mxu0 0.0
    %705 = vmatpush1.msra.mxu0 0.0
    %706 = vmatprep.subr.mxu0 0.0
    %707 = vmatpush1.msra.mxu0 0.0
    %708 = vmatprep.subr.mxu0 0.0
    %709 = vmatpush1.msra.mxu0 0.0
    %710 = vmatprep.subr.mxu0 0.0
    %711 = vmatpush1.msra.mxu0 0.0
    %712 = vmatprep.subr.mxu0 0.0
    %713 = vmatpush1.msra.mxu0 0.0
    %714 = vmatprep.subr.mxu0 0.0
    %715 = vmatpush1.msra.mxu0 0.0
    %716 = vmatprep.subr.mxu0 0.0
    %717 = vmatpush1.msra.mxu0 0.0
    %718 = vmatprep.subr.mxu0 0.0
    %719 = vmatpush1.msra.mxu0 0.0
    %720 = vmatprep.subr.mxu0 0.0
    %721 = vmatpush1.msra.mxu0 0.0
    %722 = vmatprep.subr.mxu0 0.0
    %723 = vmatpush1.msra.mxu0 0.0
    %724 = vmatprep.subr.mxu0 0.0
    %725 = vmatpush1.msra.mxu0 0.0
    %726 = vmatprep.subr.mxu0 0.0
    %727 = vmatpush1.msra.mxu0 0.0
    %728 = vmatprep.subr.mxu0 0.0
    %729 = vmatpush1.msra.mxu0 0.0
    %730 = vmatprep.subr.mxu0 0.0
    %731 = vmatpush1.msra.mxu0 0.0
    %732 = vmatprep.subr.mxu0 0.0
    %733 = vmatpush1.msra.mxu0 0.0
    %734 = vmatprep.subr.mxu0 0.0
    %735 = vmatpush1.msra.mxu0 0.0
    %736 = vmatprep.subr.mxu0 0.0
    %737 = vmatpush1.msra.mxu0 0.0
    %738 = vmatprep.subr.mxu0 0.0
    %739 = vmatpush1.msra.mxu0 0.0
    %740 = vmatprep.subr.mxu0 0.0
    %741 = vmatpush1.msra.mxu0 0.0
    %742 = vmatprep.subr.mxu0 0.0
    %743 = vmatpush1.msra.mxu0 0.0
    %744 = vmatprep.subr.mxu0 0.0
    %745 = vmatpush1.msra.mxu0 0.0
    %746 = vmatprep.subr.mxu0 0.0
    %747 = vmatpush1.msra.mxu0 0.0
    %748 = vmatprep.subr.mxu0 0.0
    %749 = vmatpush1.msra.mxu0 0.0
    %750 = vmatprep.subr.mxu0 0.0
    %751 = vmatpush1.msra.mxu0 0.0
    %752 = vmatprep.subr.mxu0 0.0
    %753 = vmatpush1.msra.mxu0 0.0
    %754 = vmatprep.subr.mxu0 0.0
    %755 = vmatpush1.msra.mxu0 0.0
    %756 = vmatprep.subr.mxu0 0.0
    %757 = vmatpush1.msra.mxu0 0.0
    %758 = vmatprep.subr.mxu0 0.0
    %759 = vmatpush1.msra.mxu0 0.0
    %760 = vmatprep.subr.mxu0 0.0
    %761 = vmatpush1.msra.mxu0 0.0
    %762 = vmatprep.subr.mxu0 0.0
    %763 = vmatpush1.msra.mxu0 0.0
    %764 = vmatprep.mubr.f32.mxu0 0.0
    %765 = vmatmul.mubr.f32.gmra.mrb[0].mxu0 %v695
    %v766 = vpop.f32.mrb[0].mxu0
    %v767 = vadd.f32 %v686, %v766
    %v768 = vpop.f32.mrb[0].mxu0
    %769 = vmatprep.mubr.f32.mxu0 0.0
    %770 = vmatmul.mubr.f32.gmra.mrb[0].mxu0 %v698
    %v771 = vpop.f32.mrb[0].mxu0
    %v772 = vadd.f32 %v691, %v771
    %v773 = vpop.f32.mrb[0].mxu0
    %774 = vdwg.mxu0
    %s775 = scalar_lea.vmem [#allocation3], 2
    %v776 = vld [vmem:[%s775] ss:$2 sm:$0xff]
    %s777 = scalar_lea.vmem [#allocation3], 20
    %v778 = vld [vmem:[%s777] ss:$2 sm:$0xff]
    %s779 = scalar_lea.vmem %s2, 16
    %v780 = vld [vmem:[%s779] sm:$0xff]
    %v782 = vsel %vm592, %v776, 0
    %v785 = vsel %vm592, %v778, 0
    %787 = vmatprep.subr.mxu0 0.0
    %788 = vmatpush1.msra.mxu0 %v780
    %789 = vmatprep.subr.mxu0 0.0
    %790 = vmatpush1.msra.mxu0 0.0
    %791 = vmatprep.subr.mxu0 0.0
    %792 = vmatpush1.msra.mxu0 0.0
    %793 = vmatprep.subr.mxu0 0.0
    %794 = vmatpush1.msra.mxu0 0.0
    %795 = vmatprep.subr.mxu0 0.0
    %796 = vmatpush1.msra.mxu0 0.0
    %797 = vmatprep.subr.mxu0 0.0
    %798 = vmatpush1.msra.mxu0 0.0
    %799 = vmatprep.subr.mxu0 0.0
    %800 = vmatpush1.msra.mxu0 0.0
    %801 = vmatprep.subr.mxu0 0.0
    %802 = vmatpush1.msra.mxu0 0.0
    %803 = vmatprep.subr.mxu0 0.0
    %804 = vmatpush1.msra.mxu0 0.0
    %805 = vmatprep.subr.mxu0 0.0
    %806 = vmatpush1.msra.mxu0 0.0
    %807 = vmatprep.subr.mxu0 0.0
    %808 = vmatpush1.msra.mxu0 0.0
    %809 = vmatprep.subr.mxu0 0.0
    %810 = vmatpush1.msra.mxu0 0.0
    %811 = vmatprep.subr.mxu0 0.0
    %812 = vmatpush1.msra.mxu0 0.0
    %813 = vmatprep.subr.mxu0 0.0
    %814 = vmatpush1.msra.mxu0 0.0
    %815 = vmatprep.subr.mxu0 0.0
    %816 = vmatpush1.msra.mxu0 0.0
    %817 = vmatprep.subr.mxu0 0.0
    %818 = vmatpush1.msra.mxu0 0.0
    %819 = vmatprep.subr.mxu0 0.0
    %820 = vmatpush1.msra.mxu0 0.0
    %821 = vmatprep.subr.mxu0 0.0
    %822 = vmatpush1.msra.mxu0 0.0
    %823 = vmatprep.subr.mxu0 0.0
    %824 = vmatpush1.msra.mxu0 0.0
    %825 = vmatprep.subr.mxu0 0.0
    %826 = vmatpush1.msra.mxu0 0.0
    %827 = vmatprep.subr.mxu0 0.0
    %828 = vmatpush1.msra.mxu0 0.0
    %829 = vmatprep.subr.mxu0 0.0
    %830 = vmatpush1.msra.mxu0 0.0
    %831 = vmatprep.subr.mxu0 0.0
    %832 = vmatpush1.msra.mxu0 0.0
    %833 = vmatprep.subr.mxu0 0.0
    %834 = vmatpush1.msra.mxu0 0.0
    %835 = vmatprep.subr.mxu0 0.0
    %836 = vmatpush1.msra.mxu0 0.0
    %837 = vmatprep.subr.mxu0 0.0
    %838 = vmatpush1.msra.mxu0 0.0
    %839 = vmatprep.subr.mxu0 0.0
    %840 = vmatpush1.msra.mxu0 0.0
    %841 = vmatprep.subr.mxu0 0.0
    %842 = vmatpush1.msra.mxu0 0.0
    %843 = vmatprep.subr.mxu0 0.0
    %844 = vmatpush1.msra.mxu0 0.0
    %845 = vmatprep.subr.mxu0 0.0
    %846 = vmatpush1.msra.mxu0 0.0
    %847 = vmatprep.subr.mxu0 0.0
    %848 = vmatpush1.msra.mxu0 0.0
    %849 = vmatprep.subr.mxu0 0.0
    %850 = vmatpush1.msra.mxu0 0.0
    %851 = vmatprep.mubr.f32.mxu0 0.0
    %852 = vmatmul.mubr.f32.gmra.mrb[0].mxu0 %v782
    %v853 = vpop.f32.mrb[0].mxu0
    %v854 = vadd.f32 0.0, %v853
    %v855 = vpop.f32.mrb[0].mxu0
    %856 = vmatprep.mubr.f32.mxu0 0.0
    %857 = vmatmul.mubr.f32.gmra.mrb[0].mxu0 %v785
    %v858 = vpop.f32.mrb[0].mxu0
    %v859 = vadd.f32 0.0, %v858
    %v860 = vpop.f32.mrb[0].mxu0
    %861 = vdwg.mxu0
    %v862 = vadd.f32 %v767, %v854
    %v863 = vadd.f32 %v772, %v859
    %vm864 = vcmask 261120
    %v865 = vsel %vm864, %v862, 0.0
    %v866 = vsel %vm864, %v863, 0.0
    %v867 = vadd.f32 %v865, %v866
    %v868 = vrot.slane %v867, 4
    %v869 = vadd.f32 %v867, %v868
    %v870 = vrot.slane %v869, 2
    %v871 = vadd.f32 %v869, %v870
    %v872 = vrot.slane %v871, 1
    %v873 = vadd.f32 %v871, %v872
    %v874 = vrcp.pop 16.0
    %v875 = vmul.f32 %v873, %v874
    %v876 = vsub.f32 %v862, %v875
    %v877 = vsub.f32 %v863, %v875
    %v878 = vmul.f32 %v876, %v876
    %v879 = vmul.f32 %v877, %v877
    %v880 = vsel %vm864, %v878, 0.0
    %v881 = vsel %vm864, %v879, 0.0
    %v882 = vadd.f32 %v880, %v881
    %v883 = vrot.slane %v882, 4
    %v884 = vadd.f32 %v882, %v883
    %v885 = vrot.slane %v884, 2
    %v886 = vadd.f32 %v884, %v885
    %v887 = vrot.slane %v886, 1
    %v888 = vadd.f32 %v886, %v887
    %v889 = vmul.f32 %v888, %v874
    %v890 = vadd.f32 %v889, 1e-05
    %v891 = vrsqrt.pop %v890
    %v892 = vld [vmem:[%s4] sm:$0x1]
    %v893 = vmul.f32 %v891, %v892
    %v894 = vlaneseq
    %v895 = vshrl.u32 %v894, 7
    %v896 = vsub.s32 0, %v895
    %v897 = vrot.slane %v893, %v896
    %v898 = vmul.f32 %v876, %v897
    %v899 = vmul.f32 %v877, %v897
    %v900 = vld [vmem:[%s5] sm:$0x1]
    %v902 = vlaneseq
    %v903 = vshrl.u32 %v902, 7
    %v904 = vsub.s32 0, %v903
    %v905 = vrot.slane %v900, %v904
    %v907 = vadd.f32 %v898, %v905
    %v908 = vadd.f32 %v899, %v905
    %909 = vst.msk [vmem:[#allocation4] sm:$0xff] %vm864, %v907
    %910 = vst.msk [vmem:[#allocation4 + $0x8] sm:$0xff] %vm864, %v908
    // Predicated region
    $region26: #{tpu_custom_call.1} parent=1 // pred_check
      _
    $region27: #{tpu_custom_call.1} parent=1 // pred_check_branch
      %912 = sbr.rel (0) target = $region29
    $region28: #{tpu_custom_call.1} parent=1 // pred_region
      %s914 = ssub.s32 256, 256
      %915 = vsyncadd [#allocation5], %s914
      %s916 = sshll.u32 [#allocation4], 4
      %s917 = int_to_ptr.vmem [resolvable:$true] %s916
      %922 = dma.vmem_to_hbm [thread:$0]  %s917, 256, %s6, [#allocation5], 128, 128, 8
    $region29: #{tpu_custom_call.1} parent=1 // pred_fallthru
      _
    // Predicated region
    $region30: #{tpu_custom_call.1} parent=1 // pred_check
      _
    $region31: #{tpu_custom_call.1} parent=1 // pred_check_branch
      %924 = sbr.rel (0) target = $region33
    $region32: #{tpu_custom_call.1} parent=1 // pred_region
      %925 = dma.done [#allocation5], 256
    $region33: #{tpu_custom_call.1} parent=1 // pred_fallthru
      _
    %926 = vsyncpa [#allocation5], 1

</llo_original>
